<compile_context>
chip_gen: v5e
topology: v5e:2x2
jax: 0.10.0
libtpu: 0.0.40
codegen_flags: <defaults>
</compile_context>

<pallas_src>
import functools

import jax
import jax.numpy as jnp
from jax.experimental import pallas as pl
from jax.experimental.pallas import tpu as pltpu


def _round_up(x, m):
    return ((x + m - 1) // m) * m


def _vmem_budget_bytes():
    """Per-generation usable VMEM budget (also used as vmem_limit_bytes)."""
    phys = 64 * 1024 * 1024
    try:
        info = pltpu.get_tpu_info()
        if info is not None and getattr(info, "vmem_capacity_bytes", None):
            phys = int(info.vmem_capacity_bytes)
    except Exception:
        pass
    if phys <= 64 * 1024 * 1024:      # v7x-class: 64 MiB physical -> leave headroom
        return 40 * 1024 * 1024
    return 100 * 1024 * 1024          # v5e/v6e-class: 128 MiB physical


# --------------------------------- kernels ----------------------------------

def _xw_kernel(x_ref, w_ref, o_ref):
    # [tm, f_in_p] @ [f_in_p, f_out_p]; bf16 operands, f32 accumulate on the MXU.
    o_ref[...] = jnp.dot(
        x_ref[...], w_ref[...], preferred_element_type=jnp.float32
    ).astype(o_ref.dtype)


def _agg_kernel(a_ref, xw_ref, b_ref, o_ref, acc_ref, *, apply_relu, tk, xw_resident):
    # acc[tm, f_out_p] += A[tm, tk] @ XW[tk, f_out_p]; finalize (+bias, relu) at last k.
    k = pl.program_id(1)

    @pl.when(k == 0)
    def _():
        acc_ref[...] = jnp.zeros_like(acc_ref)

    if xw_resident:
        # XW is fully VMEM-resident (same block for every grid step); slice the rows
        # matching this contraction tile.
        off = pl.multiple_of(k * tk, 256)
        xw = xw_ref[pl.ds(off, tk), :]
    else:
        xw = xw_ref[...]

    acc_ref[...] += jnp.dot(a_ref[...], xw, preferred_element_type=jnp.float32)

    @pl.when(k == pl.num_programs(1) - 1)
    def _():
        h = acc_ref[...] + b_ref[...]
        if apply_relu:
            h = jnp.maximum(h, 0.0)
        o_ref[...] = h.astype(o_ref.dtype)


def _make_fused_kernel(n_layer, relu_flags):
    """Whole-network kernel: A_hat and all layer params resident in VMEM."""

    def kernel(*refs):
        a_ref, x_ref = refs[0], refs[1]
        o_ref = refs[-1]
        a = a_ref[...]            # bf16 [n_pad, n_pad], padded rows/cols are zero
        h = x_ref[...]            # bf16 [n_pad, f_in0_p]
        for l in range(n_layer):
            w = refs[2 + 2 * l][...]      # bf16 [f_in_p, f_out_p]
            b = refs[3 + 2 * l][...]      # f32  [1, f_out_p]
            xw = jnp.dot(h, w, preferred_element_type=jnp.float32).astype(jnp.bfloat16)
            hf = jnp.dot(a, xw, preferred_element_type=jnp.float32) + b
            if relu_flags[l]:
                hf = jnp.maximum(hf, 0.0)
            h = hf.astype(jnp.bfloat16) if l + 1 < n_layer else hf
        o_ref[...] = h.astype(o_ref.dtype)

    return kernel


# --------------------------------- wrappers ---------------------------------

def xw_matmul(x_pad, w_pad, *, vmem_limit):
    """X @ W, tiled over node rows; W resident. x_pad [N_pad, F_in_p] bf16."""
    n_pad, f_in_p = x_pad.shape
    f_out_p = w_pad.shape[1]
    tmx = 128
    for cand in (2048, 1024, 512, 256, 128):
        blk = 2 * cand * f_in_p * 2 + 2 * cand * f_out_p * 2 + 2 * f_in_p * f_out_p * 2
        if n_pad % cand == 0 and blk <= vmem_limit // 2:
            tmx = cand
            break
    return pl.pallas_call(
        _xw_kernel,
        out_shape=jax.ShapeDtypeStruct((n_pad, f_out_p), jnp.bfloat16),
        grid=(n_pad // tmx,),
        in_specs=[
            pl.BlockSpec((tmx, f_in_p), lambda i: (i, 0)),
            pl.BlockSpec((f_in_p, f_out_p), lambda i: (0, 0)),
        ],
        out_specs=pl.BlockSpec((tmx, f_out_p), lambda i: (i, 0)),
        compiler_params=pltpu.CompilerParams(
            dimension_semantics=("parallel",),
            vmem_limit_bytes=vmem_limit,
        ),
    )(x_pad, w_pad)


def gcn_aggregate(a_pad, xw_pad, b_pad, *, apply_relu, out_dtype, tm, tk,
                  xw_resident, vmem_limit):
    """A_hat @ XW + b (+relu), tiled over (row tiles, contraction tiles)."""
    n_pad = a_pad.shape[0]
    f_out_p = xw_pad.shape[1]
    kernel = functools.partial(_agg_kernel, apply_relu=apply_relu, tk=tk,
                               xw_resident=xw_resident)
    if xw_resident:
        xw_spec = pl.BlockSpec((n_pad, f_out_p), lambda i, k: (0, 0))   # resident
    else:
        xw_spec = pl.BlockSpec((tk, f_out_p), lambda i, k: (k, 0))
    return pl.pallas_call(
        kernel,
        out_shape=jax.ShapeDtypeStruct((n_pad, f_out_p), out_dtype),
        grid=(n_pad // tm, n_pad // tk),
        in_specs=[
            pl.BlockSpec((tm, tk), lambda i, k: (i, k)),          # A tile (streamed)
            xw_spec,                                              # XW (resident/tiled)
            pl.BlockSpec((1, f_out_p), lambda i, k: (0, 0)),      # bias
        ],
        out_specs=pl.BlockSpec((tm, f_out_p), lambda i, k: (i, 0)),
        scratch_shapes=[pltpu.VMEM((tm, f_out_p), jnp.float32)],
        compiler_params=pltpu.CompilerParams(
            dimension_semantics=("parallel", "arbitrary"),
            vmem_limit_bytes=vmem_limit,
        ),
    )(a_pad, xw_pad, b_pad)


def gcn_forward_fused(a_pad, x_pad, weights_pad, biases_pad, relu_flags, vmem_limit):
    """Whole layer loop in a single pallas_call with A_hat resident in VMEM."""
    n_pad = a_pad.shape[0]
    f_out_last_p = weights_pad[-1].shape[1]
    n_layer = len(weights_pad)
    kernel = _make_fused_kernel(n_layer, tuple(relu_flags))
    ins = [a_pad, x_pad]
    for w, b in zip(weights_pad, biases_pad):
        ins += [w, b]
    return pl.pallas_call(
        kernel,
        out_shape=jax.ShapeDtypeStruct((n_pad, f_out_last_p), jnp.float32),
        in_specs=[pl.BlockSpec(memory_space=pltpu.MemorySpace.VMEM)] * len(ins),
        out_specs=pl.BlockSpec(memory_space=pltpu.MemorySpace.VMEM),
        compiler_params=pltpu.CompilerParams(vmem_limit_bytes=vmem_limit),
    )(*ins)


# --------------------------- tile-size selection -----------------------------

def _choose_agg_tiles(n, f_out_p, out_bytes, budget):
    """Pick (tm, tk, n_pad, xw_resident) for the tiled aggregation path."""
    n0 = _round_up(n, 256)
    for cand in (8192, 4096, 2048, 1024, 512, 256):
        np_c = _round_up(n, cand)
        if np_c - n0 > n0 // 8:                    # cap padding waste
            continue
        resident = (2 * np_c * f_out_p * 2) <= budget // 3

        def fits(tm, _cand=cand, _np=np_c, _res=resident):
            a_b = 2 * tm * _cand * 2                                   # A double-buffered
            xw_b = 2 * _np * f_out_p * 2 if _res else 2 * _cand * f_out_p * 2
            acc_b = tm * f_out_p * 4
            out_b = 2 * tm * f_out_p * out_bytes
            return a_b + xw_b + acc_b + out_b + (2 << 20) <= budget

        if fits(256):
            tm = 512 if (np_c % 512 == 0 and fits(512)) else 256
            return tm, cand, np_c, resident
    n_pad = n0
    resident = (2 * n_pad * f_out_p * 2) <= budget // 3
    return 256, 256, n_pad, resident


# ------------------------------ plain-JAX glue -------------------------------

def build_normalized_adjacency(edge_index, edge_weight, num_nodes, n_pad,
                               dtype=jnp.bfloat16):
    """Build the padded, normalized adjacency D^{-1/2}(A + remaining self loops)D^{-1/2}
    directly into an (n_pad, n_pad) buffer of `dtype` (single materialization).

    Matches PyG gcn_norm / add_remaining_self_loops: a self-loop (weight 1) is only
    added to nodes that do not already have one in edge_index. Padded rows/columns
    (indices >= num_nodes) are guaranteed zero.
    """
    src, dst = edge_index[0], edge_index[1]
    if edge_weight is None:
        w = jnp.ones(src.shape[0], dtype=jnp.float32)
    else:
        w = edge_weight.astype(jnp.float32)

    is_self = (src == dst)
    has_self = jnp.zeros((num_nodes,), jnp.float32).at[dst].max(
        jnp.where(is_self, 1.0, 0.0))
    add_self = jnp.where(has_self > 0.0, 0.0, 1.0)          # remaining self-loop weight

    deg = jnp.zeros((num_nodes,), jnp.float32).at[dst].add(w) + add_self
    d_inv_sqrt = jnp.where(deg > 0.0, jax.lax.rsqrt(deg), 0.0)

    norm_w = (d_inv_sqrt[dst] * w * d_inv_sqrt[src]).astype(dtype)
    a = jnp.zeros((n_pad, n_pad), dtype)
    a = a.at[dst, src].add(norm_w)                           # messages src -> dst
    idx = jnp.arange(num_nodes)
    a = a.at[idx, idx].add((add_self * d_inv_sqrt * d_inv_sqrt).astype(dtype))
    return a


# ---------------------------------- model ------------------------------------

class GNNPallas:
    """GNN backbone with GCNConv layers, forward pass via fused Pallas TPU kernels."""

    def __init__(self, n_feat, n_hid, n_cls, dropout, n_layer, encoder=False, key=None):
        self.dropout = dropout        # eval mode -> dropout is identity
        self.encoder = encoder
        self.n_layer = n_layer
        if key is None:
            key = jax.random.PRNGKey(0)

        self.weights = []        # unpadded f32 (reference / export)
        self.biases = []
        self.weights_pad = []    # 128-lane padded bf16 (kernel operands)
        self.biases_pad = []
        self.dims = []
        for layer in range(n_layer):
            f_in = n_feat if layer == 0 else n_hid
            f_out = n_cls if layer + 1 == n_layer else n_hid
            key, wk = jax.random.split(key)
            # Glorot-uniform init (deterministic), matching GCNConv default.
            limit = (6.0 / (f_in + f_out)) ** 0.5
            w = jax.random.uniform(wk, (f_in, f_out), jnp.float32, -limit, limit)
            b = jnp.zeros((f_out,), jnp.float32)
            self.weights.append(w)
            self.biases.append(b)

            f_in_p, f_out_p = _round_up(f_in, 128), _round_up(f_out, 128)
            w_pad = jnp.zeros((f_in_p, f_out_p), jnp.bfloat16)
            w_pad = w_pad.at[:f_in, :f_out].set(w.astype(jnp.bfloat16))
            b_pad = jnp.zeros((1, f_out_p), jnp.float32).at[0, :f_out].set(b)
            self.weights_pad.append(w_pad)
            self.biases_pad.append(b_pad)
            self.dims.append((f_in, f_out))

    def forward(self, x, edge_index, edge_weight=None, force_path=None):
        n = x.shape[0]
        budget = _vmem_budget_bytes()

        f_in0 = self.dims[0][0]
        f_in0_p = self.weights_pad[0].shape[0]
        f_out_last = self.dims[-1][1]
        f_out_p_max = max(w.shape[1] for w in self.weights_pad)
        relu_flags = [self.encoder or (l + 1 < self.n_layer)
                      for l in range(self.n_layer)]

        # ---------- path decision (fused small-graph vs tiled large-graph) ----------
        n_pad_f = _round_up(n, 128)
        max_fp = max(f_in0_p, f_out_p_max)
        fused_est = (n_pad_f * n_pad_f * 2                       # A bf16, resident
                     + n_pad_f * f_in0_p * 2                     # X bf16
                     + sum(int(w.size) * 2 for w in self.weights_pad)
                     + n_pad_f * f_out_p_max * 4                 # output f32
                     + 8 * n_pad_f * max_fp * 4)                 # compiler temps margin
        if force_path == "fused":
            use_fused = True
        elif force_path == "tiled":
            use_fused = False
        else:
            use_fused = fused_est <= int(budget * 0.7)

        if use_fused:
            n_pad = n_pad_f
            a_pad = build_normalized_adjacency(edge_index, edge_weight, n, n_pad)
            x_pad = jnp.zeros((n_pad, f_in0_p), jnp.bfloat16)
            x_pad = x_pad.at[:n, :f_in0].set(x.astype(jnp.bfloat16))
            out = gcn_forward_fused(a_pad, x_pad, self.weights_pad, self.biases_pad,
                                    relu_flags, budget)
            return out[:n, :f_out_last]

        # --------------------------- tiled large-graph path ---------------------------
        tm, tk, n_pad, xw_resident = _choose_agg_tiles(n, f_out_p_max, 4, budget)
        a_pad = build_normalized_adjacency(edge_index, edge_weight, n, n_pad)
        h = jnp.zeros((n_pad, f_in0_p), jnp.bfloat16)
        h = h.at[:n, :f_in0].set(x.astype(jnp.bfloat16))

        for l in range(self.n_layer):
            is_last = l + 1 == self.n_layer
            out_dtype = jnp.float32 if is_last else jnp.bfloat16
            xw = xw_matmul(h, self.weights_pad[l], vmem_limit=budget)
            h = gcn_aggregate(a_pad, xw, self.biases_pad[l],
                              apply_relu=relu_flags[l], out_dtype=out_dtype,
                              tm=tm, tk=tk, xw_resident=xw_resident,
                              vmem_limit=budget)
        return h[:n, :f_out_last]

    __call__ = forward


# ----------------------------------- demo ------------------------------------

if __name__ == "__main__":
    N, N_FEAT, N_HID, N_CLS, N_LAYER = 16, 8, 32, 4, 2

    key = jax.random.PRNGKey(0)
    kx, kmodel, kx2 = jax.random.split(key, 3)

    model = GNNPallas(N_FEAT, N_HID, N_CLS, dropout=0.5, n_layer=N_LAYER,
                      encoder=False, key=kmodel)

    def ring_graph(n):
        idx = jnp.arange(n, dtype=jnp.int32)
        src = jnp.concatenate([idx, (idx + 1) % n])
        dst = jnp.concatenate([(idx + 1) % n, idx])
        return jnp.stack([src, dst], axis=0)

    def reference(x, edge_index, n):
        a = build_normalized_adjacency(edge_index, None, n, n, dtype=jnp.float32)
        h = x
        for l in range(N_LAYER):
            h = a @ (h @ model.weights[l]) + model.biases[l][None, :]
            if l != N_LAYER - 1:
                h = jnp.maximum(h, 0.0)
        return h

    # --- Test 1: small graph -> fused (A-resident, single pallas_call) path ---
    x = jax.random.normal(kx, (N, N_FEAT), dtype=jnp.float32)
    edge_index = ring_graph(N)
    out = jax.block_until_ready(model(x, edge_index))
    assert out.shape == (N, N_CLS), out.shape
    ref = reference(x, edge_index, N)
    err = float(jnp.max(jnp.abs(out - ref)))
    assert jnp.allclose(out, ref, rtol=5e-2, atol=5e-2), err

    # --- Test 2: force the tiled (large-graph) path to exercise the grid kernels ---
    N2 = 600
    x2 = jax.random.normal(kx2, (N2, N_FEAT), dtype=jnp.float32)
    edge_index2 = ring_graph(N2)
    out2 = jax.block_until_ready(model(x2, edge_index2, force_path="tiled"))
    assert out2.shape == (N2, N_CLS), out2.shape
    ref2 = reference(x2, edge_index2, N2)
    err2 = float(jnp.max(jnp.abs(out2 - ref2)))
    assert jnp.allclose(out2, ref2, rtol=5e-2, atol=6e-2), err2

    print("KERNEL_OK")
</pallas_src>

<mosaic_0001>
module attributes {stable_mosaic.version = 11 : i64} {
  func.func @kernel(%arg0: memref<128x128xbf16, #tpu.memory_space<vmem>>, %arg1: memref<128x128xbf16, #tpu.memory_space<vmem>>, %arg2: memref<128x128xbf16, #tpu.memory_space<vmem>>, %arg3: memref<1x128xf32, #tpu.memory_space<vmem>>, %arg4: memref<128x128xbf16, #tpu.memory_space<vmem>>, %arg5: memref<1x128xf32, #tpu.memory_space<vmem>>, %arg6: memref<128x128xf32, #tpu.memory_space<vmem>>) attributes {dimension_semantics = [], scalar_prefetch = 0 : i64, scratch_operands = 0 : i64, tpu.core_type = #tpu.core_type<tc>} {
    %c0 = arith.constant 0 : index
    %c0_0 = arith.constant 0 : index
    %0 = vector.load %arg0[%c0, %c0_0] : memref<128x128xbf16, #tpu.memory_space<vmem>>, vector<128x128xbf16>
    %c0_1 = arith.constant 0 : index
    %c0_2 = arith.constant 0 : index
    %1 = vector.load %arg1[%c0_1, %c0_2] : memref<128x128xbf16, #tpu.memory_space<vmem>>, vector<128x128xbf16>
    %c0_3 = arith.constant 0 : index
    %c0_4 = arith.constant 0 : index
    %2 = vector.load %arg2[%c0_3, %c0_4] : memref<128x128xbf16, #tpu.memory_space<vmem>>, vector<128x128xbf16>
    %c0_5 = arith.constant 0 : index
    %c0_6 = arith.constant 0 : index
    %3 = vector.load %arg3[%c0_5, %c0_6] : memref<1x128xf32, #tpu.memory_space<vmem>>, vector<1x128xf32>
    %cst = arith.constant dense<0.000000e+00> : vector<128x128xf32>
    %4 = tpu.matmul %1, %2, %cst {dimension_numbers = #tpu.dot_dimension_numbers<[1], [0], [0], [1], [0, 0, 1, 1], [], []>} : vector<128x128xbf16>, vector<128x128xbf16>, vector<128x128xf32> -> vector<128x128xf32>
    %5 = arith.truncf %4 : vector<128x128xf32> to vector<128x128xbf16>
    %cst_7 = arith.constant dense<0.000000e+00> : vector<128x128xf32>
    %6 = tpu.matmul %0, %5, %cst_7 {dimension_numbers = #tpu.dot_dimension_numbers<[1], [0], [0], [1], [0, 0, 1, 1], [], []>} : vector<128x128xbf16>, vector<128x128xbf16>, vector<128x128xf32> -> vector<128x128xf32>
    %7 = vector.broadcast %3 : vector<1x128xf32> to vector<128x128xf32>
    %8 = arith.addf %6, %7 : vector<128x128xf32>
    %cst_8 = arith.constant 0.000000e+00 : f32
    %9 = vector.broadcast %cst_8 : f32 to vector<128x128xf32>
    %10 = arith.maximumf %8, %9 : vector<128x128xf32>
    %11 = arith.truncf %10 : vector<128x128xf32> to vector<128x128xbf16>
    %c0_9 = arith.constant 0 : index
    %c0_10 = arith.constant 0 : index
    %12 = vector.load %arg4[%c0_9, %c0_10] : memref<128x128xbf16, #tpu.memory_space<vmem>>, vector<128x128xbf16>
    %c0_11 = arith.constant 0 : index
    %c0_12 = arith.constant 0 : index
    %13 = vector.load %arg5[%c0_11, %c0_12] : memref<1x128xf32, #tpu.memory_space<vmem>>, vector<1x128xf32>
    %cst_13 = arith.constant dense<0.000000e+00> : vector<128x128xf32>
    %14 = tpu.matmul %11, %12, %cst_13 {dimension_numbers = #tpu.dot_dimension_numbers<[1], [0], [0], [1], [0, 0, 1, 1], [], []>} : vector<128x128xbf16>, vector<128x128xbf16>, vector<128x128xf32> -> vector<128x128xf32>
    %15 = arith.truncf %14 : vector<128x128xf32> to vector<128x128xbf16>
    %cst_14 = arith.constant dense<0.000000e+00> : vector<128x128xf32>
    %16 = tpu.matmul %0, %15, %cst_14 {dimension_numbers = #tpu.dot_dimension_numbers<[1], [0], [0], [1], [0, 0, 1, 1], [], []>} : vector<128x128xbf16>, vector<128x128xbf16>, vector<128x128xf32> -> vector<128x128xf32>
    %17 = vector.broadcast %13 : vector<1x128xf32> to vector<128x128xf32>
    %18 = arith.addf %16, %17 : vector<128x128xf32>
    %c0_15 = arith.constant 0 : index
    %c0_16 = arith.constant 0 : index
    %19 = vector.load %arg6[%c0_15, %c0_16] : memref<128x128xf32, #tpu.memory_space<vmem>>, vector<128x128xf32>
    tpu.vector_store %arg6[%c0_15, %c0_16], %18 {strides = array<i32>} : memref<128x128xf32, #tpu.memory_space<vmem>>, vector<128x128xf32>,
    return
  }
}

</mosaic_0001>

<llo_original>
// kernel: tpu_custom_call.1
$region0: #{tpu_custom_call.1}
  #allocation0 [shape = 'u32[]', space=smem, size = 0x4, offset = 0x4, fixed_abs, tag = 'smem constant byte address 0x4 - core index']
  #allocation1 [shape = 'u32[72,128]{1,0:T(1,128)}', space=vmem, size = 0x9000, scoped, tag = 'internal scratch']
  %s0 = inlined_call_operand.hbm [shape: bf16[128,128], index: 0, kind: input, shape index: {}]
  %s1 = inlined_call_operand.hbm [shape: bf16[128,128], index: 1, kind: input, shape index: {}]
  %s2 = inlined_call_operand.hbm [shape: bf16[128,128], index: 2, kind: input, shape index: {}]
  %s3 = inlined_call_operand.vmem [shape: f32[1,128], index: 3, kind: input, shape index: {}]
  %s4 = inlined_call_operand.hbm [shape: bf16[128,128], index: 4, kind: input, shape index: {}]
  %s5 = inlined_call_operand.vmem [shape: f32[1,128], index: 5, kind: input, shape index: {}]
  %s6 = inlined_call_operand.hbm [shape: f32[128,128], index: 6, kind: output, shape index: {}]
  %s7 = sld [smem:[#allocation0]]
  $region50: #{tpu_custom_call.1} parent=0
    _
  %s9 = ssub.s32 1, %s7
  %s10 = scalar_select 0, %s9, %s7
  $region1: #{tpu_custom_call.1} parent=0
    #allocation2 [shape = 'u8[32768]{0}', space=vmem, size = 0x8000, scoped, tag = 'input window, operand 0, single buffered']
    #allocation3 [shape = 's32[1]{0}', space=sflag, size = 0x4, scoped, tag = 'scoped memory for tpu_custom_call.1']
    #allocation4 [shape = 's32[1]{0}', space=sflag, size = 0x4, scoped, tag = 'scoped memory for tpu_custom_call.1']
    #allocation5 [shape = 'u8[32768]{0}', space=vmem, size = 0x8000, scoped, tag = 'input window, operand 1, single buffered']
    #allocation6 [shape = 's32[1]{0}', space=sflag, size = 0x4, scoped, tag = 'scoped memory for tpu_custom_call.1']
    #allocation7 [shape = 'u8[32768]{0}', space=vmem, size = 0x8000, scoped, tag = 'input window, operand 2, single buffered']
    #allocation8 [shape = 'u8[32768]{0}', space=vmem, size = 0x8000, scoped, tag = 'input window, operand 4, single buffered']
    #allocation9 [shape = 's32[1]{0}', space=sflag, size = 0x4, scoped, tag = 'scoped memory for tpu_custom_call.1']
    #allocation10 [shape = 'u8[65536]{0}', space=vmem, size = 0x10000, scoped, tag = 'output window, operand 0, single buffered']
    %11 = vsyncpa [#allocation3], 0
    %12 = vsyncpa [#allocation6], 0
    %13 = vsyncpa [#allocation9], 0
    %14 = vsyncpa [#allocation4], 0
    // Predicated region
    $region2: #{tpu_custom_call.1} parent=1 // pred_check
      _
    $region3: #{tpu_custom_call.1} parent=1 // pred_check_branch
      %16 = sbr.rel (0) target = $region5
    $region4: #{tpu_custom_call.1} parent=1 // pred_region
      %18 = vsyncadd [#allocation3], 0
      %s19 = sshll.u32 %s0, 4
      %s20 = int_to_ptr.hbm [resolvable:$true] %s19
      %s21 = sshll.u32 [#allocation2], 4
      %s22 = int_to_ptr.vmem [resolvable:$true] %s21
      %27 = dma.hbm_to_vmem [thread:$0]  %s20, 1024, %s22, [#allocation3], 64, 64, 4
    $region5: #{tpu_custom_call.1} parent=1 // pred_fallthru
      _
    // Predicated region
    $region6: #{tpu_custom_call.1} parent=1 // pred_check
      _
    $region7: #{tpu_custom_call.1} parent=1 // pred_check_branch
      %29 = sbr.rel (0) target = $region9
    $region8: #{tpu_custom_call.1} parent=1 // pred_region
      %31 = vsyncadd [#allocation6], 0
      %s32 = sshll.u32 %s1, 4
      %s33 = int_to_ptr.hbm [resolvable:$true] %s32
      %s34 = sshll.u32 [#allocation5], 4
      %s35 = int_to_ptr.vmem [resolvable:$true] %s34
      %40 = dma.hbm_to_vmem [thread:$0]  %s33, 1024, %s35, [#allocation6], 64, 64, 4
    $region9: #{tpu_custom_call.1} parent=1 // pred_fallthru
      _
    // Predicated region
    $region10: #{tpu_custom_call.1} parent=1 // pred_check
      _
    $region11: #{tpu_custom_call.1} parent=1 // pred_check_branch
      %42 = sbr.rel (0) target = $region13
    $region12: #{tpu_custom_call.1} parent=1 // pred_region
      %44 = vsyncadd [#allocation6], 0
      %s45 = sshll.u32 %s2, 4
      %s46 = int_to_ptr.hbm [resolvable:$true] %s45
      %s47 = sshll.u32 [#allocation7], 4
      %s48 = int_to_ptr.vmem [resolvable:$true] %s47
      %53 = dma.hbm_to_vmem [thread:$0]  %s46, 1024, %s48, [#allocation6], 64, 64, 4
    $region13: #{tpu_custom_call.1} parent=1 // pred_fallthru
      _
    // Predicated region
    $region14: #{tpu_custom_call.1} parent=1 // pred_check
      _
    $region15: #{tpu_custom_call.1} parent=1 // pred_check_branch
      %55 = sbr.rel (0) target = $region17
    $region16: #{tpu_custom_call.1} parent=1 // pred_region
      _
    $region17: #{tpu_custom_call.1} parent=1 // pred_fallthru
      _
    // Predicated region
    $region18: #{tpu_custom_call.1} parent=1 // pred_check
      _
    $region19: #{tpu_custom_call.1} parent=1 // pred_check_branch
      %57 = sbr.rel (0) target = $region21
    $region20: #{tpu_custom_call.1} parent=1 // pred_region
      %59 = vsyncadd [#allocation9], 0
      %s60 = sshll.u32 %s4, 4
      %s61 = int_to_ptr.hbm [resolvable:$true] %s60
      %s62 = sshll.u32 [#allocation8], 4
      %s63 = int_to_ptr.vmem [resolvable:$true] %s62
      %68 = dma.hbm_to_vmem [thread:$0]  %s61, 1024, %s63, [#allocation9], 64, 64, 4
    $region21: #{tpu_custom_call.1} parent=1 // pred_fallthru
      _
    // Predicated region
    $region22: #{tpu_custom_call.1} parent=1 // pred_check
      _
    $region23: #{tpu_custom_call.1} parent=1 // pred_check_branch
      %70 = sbr.rel (0) target = $region25
    $region24: #{tpu_custom_call.1} parent=1 // pred_region
      _
    $region25: #{tpu_custom_call.1} parent=1 // pred_fallthru
      _
    // Predicated region
    $region26: #{tpu_custom_call.1} parent=1 // pred_check
      _
    $region27: #{tpu_custom_call.1} parent=1 // pred_check_branch
      %72 = sbr.rel (0) target = $region29
    $region28: #{tpu_custom_call.1} parent=1 // pred_region
      %74 = dma.done [#allocation3], 1024
    $region29: #{tpu_custom_call.1} parent=1 // pred_fallthru
      _
    // Predicated region
    $region30: #{tpu_custom_call.1} parent=1 // pred_check
      _
    $region31: #{tpu_custom_call.1} parent=1 // pred_check_branch
      %76 = sbr.rel (0) target = $region33
    $region32: #{tpu_custom_call.1} parent=1 // pred_region
      %78 = dma.done [#allocation6], 1024
    $region33: #{tpu_custom_call.1} parent=1 // pred_fallthru
      _
    // Predicated region
    $region34: #{tpu_custom_call.1} parent=1 // pred_check
      _
    $region35: #{tpu_custom_call.1} parent=1 // pred_check_branch
      %80 = sbr.rel (0) target = $region37
    $region36: #{tpu_custom_call.1} parent=1 // pred_region
      %82 = dma.done [#allocation6], 1024
    $region37: #{tpu_custom_call.1} parent=1 // pred_fallthru
      _
    // Predicated region
    $region38: #{tpu_custom_call.1} parent=1 // pred_check
      _
    $region39: #{tpu_custom_call.1} parent=1 // pred_check_branch
      %84 = sbr.rel (0) target = $region41
    $region40: #{tpu_custom_call.1} parent=1 // pred_region
      %86 = dma.done [#allocation9], 1024
    $region41: #{tpu_custom_call.1} parent=1 // pred_fallthru
      _
    %v87 = vld [vmem:[#allocation2] sm:$0xf]
    %v88 = vld [vmem:[#allocation2 + $0x4] sm:$0xf]
    %v89 = vld [vmem:[#allocation2 + $0x8] sm:$0xf]
    %v90 = vld [vmem:[#allocation2 + $0xc] sm:$0xf]
    %v91 = vld [vmem:[#allocation2 + $0x10] sm:$0xf]
    %v92 = vld [vmem:[#allocation2 + $0x14] sm:$0xf]
    %v93 = vld [vmem:[#allocation2 + $0x18] sm:$0xf]
    %v94 = vld [vmem:[#allocation2 + $0x1c] sm:$0xf]
    %v95 = vld [vmem:[#allocation2 + $0x20] sm:$0xf]
    %v96 = vld [vmem:[#allocation2 + $0x24] sm:$0xf]
    %v97 = vld [vmem:[#allocation2 + $0x28] sm:$0xf]
    %v98 = vld [vmem:[#allocation2 + $0x2c] sm:$0xf]
    %v99 = vld [vmem:[#allocation2 + $0x30] sm:$0xf]
    %v100 = vld [vmem:[#allocation2 + $0x34] sm:$0xf]
    %v101 = vld [vmem:[#allocation2 + $0x38] sm:$0xf]
    %v102 = vld [vmem:[#allocation2 + $0x3c] sm:$0xf]
    %v103 = vld [vmem:[#allocation5] sm:$0xf]
    %v104 = vld [vmem:[#allocation5 + $0x4] sm:$0xf]
    %v105 = vld [vmem:[#allocation5 + $0x8] sm:$0xf]
    %v106 = vld [vmem:[#allocation5 + $0xc] sm:$0xf]
    %v107 = vld [vmem:[#allocation5 + $0x10] sm:$0xf]
    %v108 = vld [vmem:[#allocation5 + $0x14] sm:$0xf]
    %v109 = vld [vmem:[#allocation5 + $0x18] sm:$0xf]
    %v110 = vld [vmem:[#allocation5 + $0x1c] sm:$0xf]
    %v111 = vld [vmem:[#allocation5 + $0x20] sm:$0xf]
    %v112 = vld [vmem:[#allocation5 + $0x24] sm:$0xf]
    %v113 = vld [vmem:[#allocation5 + $0x28] sm:$0xf]
    %v114 = vld [vmem:[#allocation5 + $0x2c] sm:$0xf]
    %v115 = vld [vmem:[#allocation5 + $0x30] sm:$0xf]
    %v116 = vld [vmem:[#allocation5 + $0x34] sm:$0xf]
    %v117 = vld [vmem:[#allocation5 + $0x38] sm:$0xf]
    %v118 = vld [vmem:[#allocation5 + $0x3c] sm:$0xf]
    %v119 = vld [vmem:[#allocation7] sm:$0xf]
    %v120 = vld [vmem:[#allocation7 + $0x4] sm:$0xf]
    %v121 = vld [vmem:[#allocation7 + $0x8] sm:$0xf]
    %v122 = vld [vmem:[#allocation7 + $0xc] sm:$0xf]
    %v123 = vld [vmem:[#allocation7 + $0x10] sm:$0xf]
    %v124 = vld [vmem:[#allocation7 + $0x14] sm:$0xf]
    %v125 = vld [vmem:[#allocation7 + $0x18] sm:$0xf]
    %v126 = vld [vmem:[#allocation7 + $0x1c] sm:$0xf]
    %v127 = vld [vmem:[#allocation7 + $0x20] sm:$0xf]
    %v128 = vld [vmem:[#allocation7 + $0x24] sm:$0xf]
    %v129 = vld [vmem:[#allocation7 + $0x28] sm:$0xf]
    %v130 = vld [vmem:[#allocation7 + $0x2c] sm:$0xf]
    %v131 = vld [vmem:[#allocation7 + $0x30] sm:$0xf]
    %v132 = vld [vmem:[#allocation7 + $0x34] sm:$0xf]
    %v133 = vld [vmem:[#allocation7 + $0x38] sm:$0xf]
    %v134 = vld [vmem:[#allocation7 + $0x3c] sm:$0xf]
    %v135 = vld [vmem:[%s3] sm:$0x1]
    %v152 = vunpack.c.l.b16 %v103
    %v153 = vunpack.c.l.b16 %v104
    %v154 = vunpack.c.l.b16 %v105
    %v155 = vunpack.c.l.b16 %v106
    %v156 = vunpack.c.l.b16 %v107
    %v157 = vunpack.c.l.b16 %v108
    %v158 = vunpack.c.l.b16 %v109
    %v159 = vunpack.c.l.b16 %v110
    %v160 = vunpack.c.l.b16 %v111
    %v161 = vunpack.c.l.b16 %v112
    %v162 = vunpack.c.l.b16 %v113
    %v163 = vunpack.c.l.b16 %v114
    %v164 = vunpack.c.l.b16 %v115
    %v165 = vunpack.c.l.b16 %v116
    %v166 = vunpack.c.l.b16 %v117
    %v167 = vunpack.c.l.b16 %v118
    %v168 = vpack.c.b16 %v153, %v152
    %v169 = vpack.c.b16 %v155, %v154
    %v170 = vpack.c.b16 %v157, %v156
    %v171 = vpack.c.b16 %v159, %v158
    %v172 = vpack.c.b16 %v161, %v160
    %v173 = vpack.c.b16 %v163, %v162
    %v174 = vpack.c.b16 %v165, %v164
    %v175 = vpack.c.b16 %v167, %v166
    %v200 = vunpack.c.l.b16 %v119
    %v201 = vunpack.c.l.b16 %v120
    %v202 = vunpack.c.l.b16 %v121
    %v203 = vunpack.c.l.b16 %v122
    %v204 = vunpack.c.l.b16 %v123
    %v205 = vunpack.c.l.b16 %v124
    %v206 = vunpack.c.l.b16 %v125
    %v207 = vunpack.c.l.b16 %v126
    %v208 = vunpack.c.l.b16 %v127
    %v209 = vunpack.c.l.b16 %v128
    %v210 = vunpack.c.l.b16 %v129
    %v211 = vunpack.c.l.b16 %v130
    %v212 = vunpack.c.l.b16 %v131
    %v213 = vunpack.c.l.b16 %v132
    %v214 = vunpack.c.l.b16 %v133
    %v215 = vunpack.c.l.b16 %v134
    %v216 = vpack.c.b16 %v201, %v200
    %v217 = vpack.c.b16 %v203, %v202
    %v218 = vpack.c.b16 %v205, %v204
    %v219 = vpack.c.b16 %v207, %v206
    %v220 = vpack.c.b16 %v209, %v208
    %v221 = vpack.c.b16 %v211, %v210
    %v222 = vpack.c.b16 %v213, %v212
    %v223 = vpack.c.b16 %v215, %v214
    %232 = vmatpush.bf16.msra.mxu0 %v223
    %233 = vmatpush.bf16.msra.mxu0 %v222
    %234 = vmatpush.bf16.msra.mxu0 %v221
    %235 = vmatpush.bf16.msra.mxu0 %v220
    %236 = vmatpush.bf16.msra.mxu0 %v219
    %237 = vmatpush.bf16.msra.mxu0 %v218
    %238 = vmatpush.bf16.msra.mxu0 %v217
    %239 = vmatpush.bf16.msra.mxu0 %v216
    %240 = vmatmul.bf16.gmra.mxu0 %v168
    %v241 = vpop.f32.mrf.mxu0
    %v242 = vadd.f32 0.0, %v241
    %v243 = vpop.f32.mrf.mxu0
    %v244 = vadd.f32 0.0, %v243
    %245 = vmatmul.bf16.gmra.mxu0 %v169
    %v246 = vpop.f32.mrf.mxu0
    %v247 = vadd.f32 0.0, %v246
    %v248 = vpop.f32.mrf.mxu0
    %v249 = vadd.f32 0.0, %v248
    %250 = vmatmul.bf16.gmra.mxu0 %v170
    %v251 = vpop.f32.mrf.mxu0
    %v252 = vadd.f32 0.0, %v251
    %v253 = vpop.f32.mrf.mxu0
    %v254 = vadd.f32 0.0, %v253
    %255 = vmatmul.bf16.gmra.mxu0 %v171
    %v256 = vpop.f32.mrf.mxu0
    %v257 = vadd.f32 0.0, %v256
    %v258 = vpop.f32.mrf.mxu0
    %v259 = vadd.f32 0.0, %v258
    %260 = vmatmul.bf16.gmra.mxu0 %v172
    %v261 = vpop.f32.mrf.mxu0
    %v262 = vadd.f32 0.0, %v261
    %v263 = vpop.f32.mrf.mxu0
    %v264 = vadd.f32 0.0, %v263
    %265 = vmatmul.bf16.gmra.mxu0 %v173
    %v266 = vpop.f32.mrf.mxu0
    %v267 = vadd.f32 0.0, %v266
    %v268 = vpop.f32.mrf.mxu0
    %v269 = vadd.f32 0.0, %v268
    %270 = vmatmul.bf16.gmra.mxu0 %v174
    %v271 = vpop.f32.mrf.mxu0
    %v272 = vadd.f32 0.0, %v271
    %v273 = vpop.f32.mrf.mxu0
    %v274 = vadd.f32 0.0, %v273
    %275 = vmatmul.bf16.gmra.mxu0 %v175
    %v276 = vpop.f32.mrf.mxu0
    %v277 = vadd.f32 0.0, %v276
    %v278 = vpop.f32.mrf.mxu0
    %v279 = vadd.f32 0.0, %v278
    %280 = vdwg.mxu0
    %v281 = vpack.c.bf16 %v244, %v242
    %v282 = vpack.c.bf16 %v249, %v247
    %v283 = vpack.c.bf16 %v254, %v252
    %v284 = vpack.c.bf16 %v259, %v257
    %v285 = vpack.c.bf16 %v264, %v262
    %v286 = vpack.c.bf16 %v269, %v267
    %v287 = vpack.c.bf16 %v274, %v272
    %v288 = vpack.c.bf16 %v279, %v277
    %v290 = vperm.slane %v135, 0
    %v308 = vunpack.c.l.b16 %v87
    %v309 = vunpack.c.l.b16 %v88
    %v310 = vunpack.c.l.b16 %v89
    %v311 = vunpack.c.l.b16 %v90
    %v312 = vunpack.c.l.b16 %v91
    %v313 = vunpack.c.l.b16 %v92
    %v314 = vunpack.c.l.b16 %v93
    %v315 = vunpack.c.l.b16 %v94
    %v316 = vunpack.c.l.b16 %v95
    %v317 = vunpack.c.l.b16 %v96
    %v318 = vunpack.c.l.b16 %v97
    %v319 = vunpack.c.l.b16 %v98
    %v320 = vunpack.c.l.b16 %v99
    %v321 = vunpack.c.l.b16 %v100
    %v322 = vunpack.c.l.b16 %v101
    %v323 = vunpack.c.l.b16 %v102
    %v324 = vpack.c.b16 %v309, %v308
    %v325 = vpack.c.b16 %v311, %v310
    %v326 = vpack.c.b16 %v313, %v312
    %v327 = vpack.c.b16 %v315, %v314
    %v328 = vpack.c.b16 %v317, %v316
    %v329 = vpack.c.b16 %v319, %v318
    %v330 = vpack.c.b16 %v321, %v320
    %v331 = vpack.c.b16 %v323, %v322
    %340 = vmatpush.bf16.msra.mxu0 %v288
    %341 = vmatpush.bf16.msra.mxu0 %v287
    %342 = vmatpush.bf16.msra.mxu0 %v286
    %343 = vmatpush.bf16.msra.mxu0 %v285
    %344 = vmatpush.bf16.msra.mxu0 %v284
    %345 = vmatpush.bf16.msra.mxu0 %v283
    %346 = vmatpush.bf16.msra.mxu0 %v282
    %347 = vmatpush.bf16.msra.mxu0 %v281
    %348 = vmatmul.bf16.gmra.mxu0 %v324
    %v349 = vpop.f32.mrf.mxu0
    %v350 = vadd.f32 %v290, %v349
    %v351 = vpop.f32.mrf.mxu0
    %v352 = vadd.f32 %v290, %v351
    %353 = vmatmul.bf16.gmra.mxu0 %v325
    %v354 = vpop.f32.mrf.mxu0
    %v355 = vadd.f32 %v290, %v354
    %v356 = vpop.f32.mrf.mxu0
    %v357 = vadd.f32 %v290, %v356
    %358 = vmatmul.bf16.gmra.mxu0 %v326
    %v359 = vpop.f32.mrf.mxu0
    %v360 = vadd.f32 %v290, %v359
    %v361 = vpop.f32.mrf.mxu0
    %v362 = vadd.f32 %v290, %v361
    %363 = vmatmul.bf16.gmra.mxu0 %v327
    %v364 = vpop.f32.mrf.mxu0
    %v365 = vadd.f32 %v290, %v364
    %v366 = vpop.f32.mrf.mxu0
    %v367 = vadd.f32 %v290, %v366
    %368 = vmatmul.bf16.gmra.mxu0 %v328
    %v369 = vpop.f32.mrf.mxu0
    %v370 = vadd.f32 %v290, %v369
    %v371 = vpop.f32.mrf.mxu0
    %v372 = vadd.f32 %v290, %v371
    %373 = vmatmul.bf16.gmra.mxu0 %v329
    %v374 = vpop.f32.mrf.mxu0
    %v375 = vadd.f32 %v290, %v374
    %v376 = vpop.f32.mrf.mxu0
    %v377 = vadd.f32 %v290, %v376
    %378 = vmatmul.bf16.gmra.mxu0 %v330
    %v379 = vpop.f32.mrf.mxu0
    %v380 = vadd.f32 %v290, %v379
    %v381 = vpop.f32.mrf.mxu0
    %v382 = vadd.f32 %v290, %v381
    %383 = vmatmul.bf16.gmra.mxu0 %v331
    %v384 = vpop.f32.mrf.mxu0
    %v385 = vadd.f32 %v290, %v384
    %v386 = vpop.f32.mrf.mxu0
    %v387 = vadd.f32 %v290, %v386
    %388 = vdwg.mxu0
    %v389 = vmax.f32 %v350, 0.0
    %v390 = vmax.f32 %v352, 0.0
    %v391 = vmax.f32 %v355, 0.0
    %v392 = vmax.f32 %v357, 0.0
    %v393 = vmax.f32 %v360, 0.0
    %v394 = vmax.f32 %v362, 0.0
    %v395 = vmax.f32 %v365, 0.0
    %v396 = vmax.f32 %v367, 0.0
    %v397 = vmax.f32 %v370, 0.0
    %v398 = vmax.f32 %v372, 0.0
    %v399 = vmax.f32 %v375, 0.0
    %v400 = vmax.f32 %v377, 0.0
    %v401 = vmax.f32 %v380, 0.0
    %v402 = vmax.f32 %v382, 0.0
    %v403 = vmax.f32 %v385, 0.0
    %v404 = vmax.f32 %v387, 0.0
    %v405 = vpack.c.bf16 %v390, %v389
    %v406 = vpack.c.bf16 %v392, %v391
    %v407 = vpack.c.bf16 %v394, %v393
    %v408 = vpack.c.bf16 %v396, %v395
    %v409 = vpack.c.bf16 %v398, %v397
    %v410 = vpack.c.bf16 %v400, %v399
    %v411 = vpack.c.bf16 %v402, %v401
    %v412 = vpack.c.bf16 %v404, %v403
    %v413 = vld [vmem:[#allocation8] sm:$0xf]
    %v414 = vld [vmem:[#allocation8 + $0x4] sm:$0xf]
    %v415 = vld [vmem:[#allocation8 + $0x8] sm:$0xf]
    %v416 = vld [vmem:[#allocation8 + $0xc] sm:$0xf]
    %v417 = vld [vmem:[#allocation8 + $0x10] sm:$0xf]
    %v418 = vld [vmem:[#allocation8 + $0x14] sm:$0xf]
    %v419 = vld [vmem:[#allocation8 + $0x18] sm:$0xf]
    %v420 = vld [vmem:[#allocation8 + $0x1c] sm:$0xf]
    %v421 = vld [vmem:[#allocation8 + $0x20] sm:$0xf]
    %v422 = vld [vmem:[#allocation8 + $0x24] sm:$0xf]
    %v423 = vld [vmem:[#allocation8 + $0x28] sm:$0xf]
    %v424 = vld [vmem:[#allocation8 + $0x2c] sm:$0xf]
    %v425 = vld [vmem:[#allocation8 + $0x30] sm:$0xf]
    %v426 = vld [vmem:[#allocation8 + $0x34] sm:$0xf]
    %v427 = vld [vmem:[#allocation8 + $0x38] sm:$0xf]
    %v428 = vld [vmem:[#allocation8 + $0x3c] sm:$0xf]
    %v429 = vld [vmem:[%s5] sm:$0x1]
    %v446 = vunpack.c.l.b16 %v413
    %v447 = vunpack.c.l.b16 %v414
    %v448 = vunpack.c.l.b16 %v415
    %v449 = vunpack.c.l.b16 %v416
    %v450 = vunpack.c.l.b16 %v417
    %v451 = vunpack.c.l.b16 %v418
    %v452 = vunpack.c.l.b16 %v419
    %v453 = vunpack.c.l.b16 %v420
    %v454 = vunpack.c.l.b16 %v421
    %v455 = vunpack.c.l.b16 %v422
    %v456 = vunpack.c.l.b16 %v423
    %v457 = vunpack.c.l.b16 %v424
    %v458 = vunpack.c.l.b16 %v425
    %v459 = vunpack.c.l.b16 %v426
    %v460 = vunpack.c.l.b16 %v427
    %v461 = vunpack.c.l.b16 %v428
    %v462 = vpack.c.b16 %v447, %v446
    %v463 = vpack.c.b16 %v449, %v448
    %v464 = vpack.c.b16 %v451, %v450
    %v465 = vpack.c.b16 %v453, %v452
    %v466 = vpack.c.b16 %v455, %v454
    %v467 = vpack.c.b16 %v457, %v456
    %v468 = vpack.c.b16 %v459, %v458
    %v469 = vpack.c.b16 %v461, %v460
    %478 = vmatpush.bf16.msra.mxu0 %v469
    %479 = vmatpush.bf16.msra.mxu0 %v468
    %480 = vmatpush.bf16.msra.mxu0 %v467
    %481 = vmatpush.bf16.msra.mxu0 %v466
    %482 = vmatpush.bf16.msra.mxu0 %v465
    %483 = vmatpush.bf16.msra.mxu0 %v464
    %484 = vmatpush.bf16.msra.mxu0 %v463
    %485 = vmatpush.bf16.msra.mxu0 %v462
    %486 = vmatmul.bf16.gmra.mxu0 %v405
    %v487 = vpop.f32.mrf.mxu0
    %v488 = vadd.f32 0.0, %v487
    %v489 = vpop.f32.mrf.mxu0
    %v490 = vadd.f32 0.0, %v489
    %491 = vmatmul.bf16.gmra.mxu0 %v406
    %v492 = vpop.f32.mrf.mxu0
    %v493 = vadd.f32 0.0, %v492
    %v494 = vpop.f32.mrf.mxu0
    %v495 = vadd.f32 0.0, %v494
    %496 = vmatmul.bf16.gmra.mxu0 %v407
    %v497 = vpop.f32.mrf.mxu0
    %v498 = vadd.f32 0.0, %v497
    %v499 = vpop.f32.mrf.mxu0
    %v500 = vadd.f32 0.0, %v499
    %501 = vmatmul.bf16.gmra.mxu0 %v408
    %v502 = vpop.f32.mrf.mxu0
    %v503 = vadd.f32 0.0, %v502
    %v504 = vpop.f32.mrf.mxu0
    %v505 = vadd.f32 0.0, %v504
    %506 = vmatmul.bf16.gmra.mxu0 %v409
    %v507 = vpop.f32.mrf.mxu0
    %v508 = vadd.f32 0.0, %v507
    %v509 = vpop.f32.mrf.mxu0
    %v510 = vadd.f32 0.0, %v509
    %511 = vmatmul.bf16.gmra.mxu0 %v410
    %v512 = vpop.f32.mrf.mxu0
    %v513 = vadd.f32 0.0, %v512
    %v514 = vpop.f32.mrf.mxu0
    %v515 = vadd.f32 0.0, %v514
    %516 = vmatmul.bf16.gmra.mxu0 %v411
    %v517 = vpop.f32.mrf.mxu0
    %v518 = vadd.f32 0.0, %v517
    %v519 = vpop.f32.mrf.mxu0
    %v520 = vadd.f32 0.0, %v519
    %521 = vmatmul.bf16.gmra.mxu0 %v412
    %v522 = vpop.f32.mrf.mxu0
    %v523 = vadd.f32 0.0, %v522
    %v524 = vpop.f32.mrf.mxu0
    %v525 = vadd.f32 0.0, %v524
    %526 = vdwg.mxu0
    %v527 = vpack.c.bf16 %v490, %v488
    %v528 = vpack.c.bf16 %v495, %v493
    %v529 = vpack.c.bf16 %v500, %v498
    %v530 = vpack.c.bf16 %v505, %v503
    %v531 = vpack.c.bf16 %v510, %v508
    %v532 = vpack.c.bf16 %v515, %v513
    %v533 = vpack.c.bf16 %v520, %v518
    %v534 = vpack.c.bf16 %v525, %v523
    %v536 = vperm.slane %v429, 0
    %538 = vmatpush.bf16.msra.mxu0 %v534
    %539 = vmatpush.bf16.msra.mxu0 %v533
    %540 = vmatpush.bf16.msra.mxu0 %v532
    %541 = vmatpush.bf16.msra.mxu0 %v531
    %542 = vmatpush.bf16.msra.mxu0 %v530
    %543 = vmatpush.bf16.msra.mxu0 %v529
    %544 = vmatpush.bf16.msra.mxu0 %v528
    %545 = vmatpush.bf16.msra.mxu0 %v527
    %546 = vmatmul.bf16.gmra.mxu0 %v324
    %v547 = vpop.f32.mrf.mxu0
    %v548 = vadd.f32 %v536, %v547
    %v549 = vpop.f32.mrf.mxu0
    %v550 = vadd.f32 %v536, %v549
    %551 = vmatmul.bf16.gmra.mxu0 %v325
    %v552 = vpop.f32.mrf.mxu0
    %v553 = vadd.f32 %v536, %v552
    %v554 = vpop.f32.mrf.mxu0
    %v555 = vadd.f32 %v536, %v554
    %556 = vmatmul.bf16.gmra.mxu0 %v326
    %v557 = vpop.f32.mrf.mxu0
    %v558 = vadd.f32 %v536, %v557
    %v559 = vpop.f32.mrf.mxu0
    %v560 = vadd.f32 %v536, %v559
    %561 = vmatmul.bf16.gmra.mxu0 %v327
    %v562 = vpop.f32.mrf.mxu0
    %v563 = vadd.f32 %v536, %v562
    %v564 = vpop.f32.mrf.mxu0
    %v565 = vadd.f32 %v536, %v564
    %566 = vmatmul.bf16.gmra.mxu0 %v328
    %v567 = vpop.f32.mrf.mxu0
    %v568 = vadd.f32 %v536, %v567
    %v569 = vpop.f32.mrf.mxu0
    %v570 = vadd.f32 %v536, %v569
    %571 = vmatmul.bf16.gmra.mxu0 %v329
    %v572 = vpop.f32.mrf.mxu0
    %v573 = vadd.f32 %v536, %v572
    %v574 = vpop.f32.mrf.mxu0
    %v575 = vadd.f32 %v536, %v574
    %576 = vmatmul.bf16.gmra.mxu0 %v330
    %v577 = vpop.f32.mrf.mxu0
    %v578 = vadd.f32 %v536, %v577
    %v579 = vpop.f32.mrf.mxu0
    %v580 = vadd.f32 %v536, %v579
    %581 = vmatmul.bf16.gmra.mxu0 %v331
    %v582 = vpop.f32.mrf.mxu0
    %v583 = vadd.f32 %v536, %v582
    %v584 = vpop.f32.mrf.mxu0
    %v585 = vadd.f32 %v536, %v584
    %586 = vdwg.mxu0
    %587 = vst [vmem:[#allocation10] sm:$0xff] %v548
    %588 = vst [vmem:[#allocation10 + $0x8] sm:$0xff] %v550
    %589 = vst [vmem:[#allocation10 + $0x10] sm:$0xff] %v553
    %590 = vst [vmem:[#allocation10 + $0x18] sm:$0xff] %v555
    %591 = vst [vmem:[#allocation10 + $0x20] sm:$0xff] %v558
    %592 = vst [vmem:[#allocation10 + $0x28] sm:$0xff] %v560
    %593 = vst [vmem:[#allocation10 + $0x30] sm:$0xff] %v563
    %594 = vst [vmem:[#allocation10 + $0x38] sm:$0xff] %v565
    %595 = vst [vmem:[#allocation10 + $0x40] sm:$0xff] %v568
    %596 = vst [vmem:[#allocation10 + $0x48] sm:$0xff] %v570
    %597 = vst [vmem:[#allocation10 + $0x50] sm:$0xff] %v573
    %598 = vst [vmem:[#allocation10 + $0x58] sm:$0xff] %v575
    %599 = vst [vmem:[#allocation10 + $0x60] sm:$0xff] %v578
    %600 = vst [vmem:[#allocation10 + $0x68] sm:$0xff] %v580
    %601 = vst [vmem:[#allocation10 + $0x70] sm:$0xff] %v583
    %602 = vst [vmem:[#allocation10 + $0x78] sm:$0xff] %v585
    // Predicated region
    $region42: #{tpu_custom_call.1} parent=1 // pred_check
      _
    $region43: #{tpu_custom_call.1} parent=1 // pred_check_branch
      %604 = sbr.rel (0) target = $region45
    $region44: #{tpu_custom_call.1} parent=1 // pred_region
      %606 = vsyncadd [#allocation4], 0
      %s607 = sshll.u32 [#allocation10], 4
      %s608 = int_to_ptr.vmem [resolvable:$true] %s607
      %s609 = sshll.u32 %s6, 4
      %s610 = int_to_ptr.hbm [resolvable:$true] %s609
      %615 = dma.vmem_to_hbm [thread:$0]  %s608, 2048, %s610, [#allocation4], 128, 128, 8
    $region45: #{tpu_custom_call.1} parent=1 // pred_fallthru
      _
    // Predicated region
    $region46: #{tpu_custom_call.1} parent=1 // pred_check
      _
    $region47: #{tpu_custom_call.1} parent=1 // pred_check_branch
      %617 = sbr.rel (0) target = $region49
    $region48: #{tpu_custom_call.1} parent=1 // pred_region
      %619 = dma.done [#allocation4], 2048
    $region49: #{tpu_custom_call.1} parent=1 // pred_fallthru
      _
    %620 = vsyncpa [#allocation3], 1
    %621 = vsyncpa [#allocation6], 1
    %622 = vsyncpa [#allocation9], 1
    %623 = vsyncpa [#allocation4], 1

</llo_original>
